<compile_context>
chip_gen: v7x
topology: tpu7x:2x2x1
jax: 0.10.0
libtpu: 0.0.40
codegen_flags: <defaults>
</compile_context>

<pallas_src>
import functools

import jax
import jax.numpy as jnp
from jax.experimental import pallas as pl
from jax.experimental.pallas import tpu as pltpu


def _kl_loss_partial_kernel(student_ref, teacher_ref, partial_ref, *,
                            inv_t, tile_b, batch):
    inv_t = jnp.float32(inv_t)

    s = student_ref[...].astype(jnp.float32) * inv_t
    t = teacher_ref[...].astype(jnp.float32) * inv_t

    # Student log_softmax over the class (lane) axis.
    s_shift = s - jnp.max(s, axis=1, keepdims=True)
    log_p = s_shift - jnp.log(jnp.sum(jnp.exp(s_shift), axis=1, keepdims=True))

    # Teacher softmax over the class (lane) axis, plus epsilon (as in PyTorch code).
    t_shift = t - jnp.max(t, axis=1, keepdims=True)
    t_exp = jnp.exp(t_shift)
    row_inv = pl.reciprocal(jnp.sum(t_exp, axis=1, keepdims=True), approx=False)
    q = t_exp * row_inv + jnp.float32(1e-7)

    # Keep jnp.log(q) (with the +1e-7 inside) for bit-parity with the PyTorch ref.
    term = q * (jnp.log(q) - log_p)

    if batch % tile_b != 0:
        # Mask out padded rows of the last (partial) tile.
        rows = (jax.lax.broadcasted_iota(jnp.int32, (tile_b, 1), 0)
                + pl.program_id(0) * tile_b)
        term = jnp.where(rows < batch, term, jnp.float32(0.0))

    # Per-tile partial sum, broadcast across a lane-dense (1, 8, 128) slab.
    partial_ref[...] = jnp.broadcast_to(jnp.sum(term), partial_ref.shape)


def _choose_tile_b(batch, num_classes):
    # ~8 f32 full-tile slabs live per step:
    #   2 inputs x 2 pipeline buffers + ~4 elementwise temporaries.
    budget_bytes = 16 * 1024 * 1024          # conservative for v5e/v6e/v7x scoped VMEM
    per_row_bytes = max(1, num_classes) * 4 * 8
    tile = budget_bytes // per_row_bytes
    tile = max(8, min(512, (tile // 8) * 8))  # multiple of 8 (sublane rule)
    padded_batch = ((batch + 7) // 8) * 8
    return min(tile, max(8, padded_batch))


def kl_loss_pallas(student_logits, teacher_logits, temperature=1.0):
    assert student_logits.shape == teacher_logits.shape
    batch, num_classes = student_logits.shape
    T = float(temperature)

    tile_b = _choose_tile_b(batch, num_classes)
    num_tiles = -(-batch // tile_b)

    kernel = functools.partial(
        _kl_loss_partial_kernel, inv_t=1.0 / T, tile_b=tile_b, batch=batch
    )

    bytes_in = (student_logits.size * student_logits.dtype.itemsize
                + teacher_logits.size * teacher_logits.dtype.itemsize)
    cost = pl.CostEstimate(
        flops=10 * batch * num_classes,
        transcendentals=3 * batch * num_classes,
        bytes_accessed=bytes_in + num_tiles * 8 * 128 * 4,
    )

    partials = pl.pallas_call(
        kernel,
        out_shape=jax.ShapeDtypeStruct((num_tiles, 8, 128), jnp.float32),
        grid_spec=pltpu.PrefetchScalarGridSpec(
            num_scalar_prefetch=0,
            grid=(num_tiles,),
            in_specs=[
                pl.BlockSpec((tile_b, num_classes), lambda i: (i, 0)),
                pl.BlockSpec((tile_b, num_classes), lambda i: (i, 0)),
            ],
            out_specs=pl.BlockSpec((1, 8, 128), lambda i: (i, 0, 0)),
        ),
        compiler_params=pltpu.CompilerParams(
            dimension_semantics=("parallel",),
            vmem_limit_bytes=32 * 1024 * 1024,
        ),
        cost_estimate=cost,
    )(student_logits, teacher_logits)

    # Tiny reduction + single application of T^2 / batch in the wrapper.
    return jnp.sum(partials[:, 0, 0]) * jnp.float32(T * T / batch)


def kl_loss_ref(student_logits, teacher_logits, temperature=1.0):
    # Pure-JAX reference for sanity checking (mirrors the PyTorch module).
    T = temperature
    log_p = jax.nn.log_softmax(student_logits.astype(jnp.float32) / T, axis=1)
    q = jax.nn.softmax(teacher_logits.astype(jnp.float32) / T, axis=1) + 1e-7
    batch = student_logits.shape[0]
    return (T * T) * jnp.sum(q * (jnp.log(q) - log_p)) / batch


if __name__ == "__main__":
    key = jax.random.PRNGKey(0)
    k1, k2, k3, k4 = jax.random.split(key, 4)

    temperature = 3.0

    # Case 1: aligned small shapes.
    batch, num_classes = 8, 32
    student = jax.random.normal(k1, (batch, num_classes), dtype=jnp.float32)
    teacher = jax.random.normal(k2, (batch, num_classes), dtype=jnp.float32)
    loss = kl_loss_pallas(student, teacher, temperature=temperature)
    jax.block_until_ready(loss)
    ref = kl_loss_ref(student, teacher, temperature=temperature)
    assert jnp.allclose(loss, ref, rtol=1e-5, atol=1e-6), (loss, ref)

    # Case 2: ragged shapes (exercises the partial-tile row mask).
    batch2, num_classes2 = 6, 20
    student2 = jax.random.normal(k3, (batch2, num_classes2), dtype=jnp.float32)
    teacher2 = jax.random.normal(k4, (batch2, num_classes2), dtype=jnp.float32)
    loss2 = kl_loss_pallas(student2, teacher2, temperature=1.0)
    jax.block_until_ready(loss2)
    ref2 = kl_loss_ref(student2, teacher2, temperature=1.0)
    assert jnp.allclose(loss2, ref2, rtol=1e-5, atol=1e-6), (loss2, ref2)

    print("KERNEL_OK")
</pallas_src>

<mosaic_0001>
module attributes {stable_mosaic.version = 11 : i64} {
  func.func @_kl_loss_partial_kernel(%arg0: i32, %arg1: memref<8x32xf32, #tpu.memory_space<vmem>>, %arg2: memref<8x32xf32, #tpu.memory_space<vmem>>, %arg3: memref<1x8x128xf32, #tpu.memory_space<vmem>>) attributes {dimension_semantics = [#tpu.dimension_semantics<parallel>], iteration_bounds = array<i64: 1>, scalar_prefetch = 0 : i64, scratch_operands = 0 : i64, tpu.core_type = #tpu.core_type<tc>, window_params = [{transform_indices = @transform_0, window_bounds = array<i64: 8, 32>}, {transform_indices = @transform_1, window_bounds = array<i64: 8, 32>}, {transform_indices = @transform_2, window_bounds = array<i64: 1, 8, 128>}]} {
    %c0 = arith.constant 0 : index
    %c0_0 = arith.constant 0 : index
    %0 = vector.load %arg1[%c0, %c0_0] : memref<8x32xf32, #tpu.memory_space<vmem>>, vector<8x32xf32>
    %cst = arith.constant 0.333333343 : f32
    %1 = vector.broadcast %cst : f32 to vector<8x32xf32>
    %2 = arith.mulf %0, %1 : vector<8x32xf32>
    %c0_1 = arith.constant 0 : index
    %c0_2 = arith.constant 0 : index
    %3 = vector.load %arg2[%c0_1, %c0_2] : memref<8x32xf32, #tpu.memory_space<vmem>>, vector<8x32xf32>
    %cst_3 = arith.constant 0.333333343 : f32
    %4 = vector.broadcast %cst_3 : f32 to vector<8x32xf32>
    %5 = arith.mulf %3, %4 : vector<8x32xf32>
    %cst_4 = arith.constant dense<0xFF800000> : vector<8xf32>
    %6 = vector.multi_reduction <maximumf>, %2, %cst_4 [1] : vector<8x32xf32> to vector<8xf32>
    %7 = vector.shape_cast %6 : vector<8xf32> to vector<8x1xf32>
    %8 = vector.broadcast %7 : vector<8x1xf32> to vector<8x32xf32>
    %9 = arith.subf %2, %8 : vector<8x32xf32>
    %10 = math.exp %9 : vector<8x32xf32>
    %cst_5 = arith.constant dense<0.000000e+00> : vector<8xf32>
    %11 = vector.multi_reduction <add>, %10, %cst_5 [1] : vector<8x32xf32> to vector<8xf32>
    %12 = vector.shape_cast %11 : vector<8xf32> to vector<8x1xf32>
    %13 = math.log %12 : vector<8x1xf32>
    %14 = vector.broadcast %13 : vector<8x1xf32> to vector<8x32xf32>
    %15 = arith.subf %9, %14 : vector<8x32xf32>
    %cst_6 = arith.constant dense<0xFF800000> : vector<8xf32>
    %16 = vector.multi_reduction <maximumf>, %5, %cst_6 [1] : vector<8x32xf32> to vector<8xf32>
    %17 = vector.shape_cast %16 : vector<8xf32> to vector<8x1xf32>
    %18 = vector.broadcast %17 : vector<8x1xf32> to vector<8x32xf32>
    %19 = arith.subf %5, %18 : vector<8x32xf32>
    %20 = math.exp %19 : vector<8x32xf32>
    %cst_7 = arith.constant dense<0.000000e+00> : vector<8xf32>
    %21 = vector.multi_reduction <add>, %20, %cst_7 [1] : vector<8x32xf32> to vector<8xf32>
    %22 = vector.shape_cast %21 : vector<8xf32> to vector<8x1xf32>
    %23 = tpu.reciprocal %22 : vector<8x1xf32> -> vector<8x1xf32>
    %24 = vector.broadcast %23 : vector<8x1xf32> to vector<8x32xf32>
    %25 = arith.mulf %20, %24 : vector<8x32xf32>
    %cst_8 = arith.constant 1.000000e-07 : f32
    %26 = vector.broadcast %cst_8 : f32 to vector<8x32xf32>
    %27 = arith.addf %25, %26 : vector<8x32xf32>
    %28 = math.log %27 : vector<8x32xf32>
    %29 = arith.subf %28, %15 : vector<8x32xf32>
    %30 = arith.mulf %27, %29 : vector<8x32xf32>
    %31 = vector.shape_cast %30 : vector<8x32xf32> to vector<1x8x32xf32>
    %cst_9 = arith.constant dense<0.000000e+00> : vector<1xf32>
    %32 = vector.multi_reduction <add>, %31, %cst_9 [1, 2] : vector<1x8x32xf32> to vector<1xf32>
    %33 = vector.shape_cast %32 : vector<1xf32> to vector<1x1x1xf32>
    %34 = vector.extract %33[0, 0, 0] : f32 from vector<1x1x1xf32>
    %35 = vector.broadcast %34 : f32 to vector<1x8x128xf32>
    %c0_10 = arith.constant 0 : index
    %c0_11 = arith.constant 0 : index
    %c0_12 = arith.constant 0 : index
    %36 = vector.load %arg3[%c0_10, %c0_11, %c0_12] : memref<1x8x128xf32, #tpu.memory_space<vmem>>, vector<1x8x128xf32>
    tpu.vector_store %arg3[%c0_10, %c0_11, %c0_12], %35 {strides = array<i32>} : memref<1x8x128xf32, #tpu.memory_space<vmem>>, vector<1x8x128xf32>,
    return
  }
  func.func @transform_0(%arg0: i32) -> (i32, i32) {
    %c0_i32 = arith.constant 0 : i32
    %c0_i32_0 = arith.constant 0 : i32
    return %arg0, %c0_i32 : i32, i32
  }
  func.func @transform_1(%arg0: i32) -> (i32, i32) {
    %c0_i32 = arith.constant 0 : i32
    %c0_i32_0 = arith.constant 0 : i32
    return %arg0, %c0_i32 : i32, i32
  }
  func.func @transform_2(%arg0: i32) -> (i32, i32, i32) {
    %c0_i32 = arith.constant 0 : i32
    %c0_i32_0 = arith.constant 0 : i32
    %c0_i32_1 = arith.constant 0 : i32
    return %arg0, %c0_i32, %c0_i32_0 : i32, i32, i32
  }
}

</mosaic_0001>

<llo_original>
// kernel: tpu_custom_call.1
$region0: #{tpu_custom_call.1}
  #allocation0 [shape = 'u32[]', space=smem, size = 0x4, offset = 0x4, fixed_abs, tag = 'smem constant byte address 0x4 - core index']
  #allocation1 [shape = 'u32[144,128]{1,0:T(1,128)}', space=vmem, size = 0x12000, scoped, tag = 'internal scratch']
  %s0 = inlined_call_operand.hbm [shape: f32[8,32], index: 0, kind: input, shape index: {}]
  %s1 = inlined_call_operand.hbm [shape: f32[8,32], index: 1, kind: input, shape index: {}]
  %s2 = inlined_call_operand.hbm [shape: f32[1,8,128], index: 2, kind: output, shape index: {}]
  %s3 = sld [smem:[#allocation0]]
  $region26: #{tpu_custom_call.1} parent=0
    _
  %s5 = ssub.s32 1, %s3
  %s6 = scalar_select 0, %s5, %s3
  $region1: #{tpu_custom_call.1} parent=0
    #allocation2 [shape = 'u8[4096]{0}', space=vmem, size = 0x1000, scoped, tag = 'input window, operand 0, single buffered']
    #allocation3 [shape = 's32[1]{0}', space=sflag, size = 0x4, scoped, tag = 'scoped memory for tpu_custom_call.1']
    #allocation4 [shape = 's32[1]{0}', space=sflag, size = 0x4, scoped, tag = 'scoped memory for tpu_custom_call.1']
    #allocation5 [shape = 'u8[4096]{0}', space=vmem, size = 0x1000, scoped, tag = 'input window, operand 1, single buffered']
    #allocation6 [shape = 's32[1]{0}', space=sflag, size = 0x4, scoped, tag = 'scoped memory for tpu_custom_call.1']
    #allocation7 [shape = 'u8[4096]{0}', space=vmem, size = 0x1000, scoped, tag = 'output window, operand 0, single buffered']
    %7 = vsyncpa [#allocation3], 0
    %8 = vsyncpa [#allocation6], 0
    %9 = vsyncpa [#allocation4], 0
    // Predicated region
    $region2: #{tpu_custom_call.1} parent=1 // pred_check
      _
    $region3: #{tpu_custom_call.1} parent=1 // pred_check_branch
      %11 = sbr.rel (0) target = $region5
    $region4: #{tpu_custom_call.1} parent=1 // pred_region
      %s13 = ssub.s32 128, 128
      %14 = vsyncadd [#allocation3], %s13
      %s16 = sshll.u32 [#allocation2], 4
      %s17 = int_to_ptr.vmem [resolvable:$true] %s16
      %19 = dma.hbm_to_vmem [thread:$0]  %s0, 128, %s17, [#allocation3]
    $region5: #{tpu_custom_call.1} parent=1 // pred_fallthru
      _
    // Predicated region
    $region6: #{tpu_custom_call.1} parent=1 // pred_check
      _
    $region7: #{tpu_custom_call.1} parent=1 // pred_check_branch
      %21 = sbr.rel (0) target = $region9
    $region8: #{tpu_custom_call.1} parent=1 // pred_region
      %s23 = ssub.s32 128, 128
      %24 = vsyncadd [#allocation6], %s23
      %s26 = sshll.u32 [#allocation5], 4
      %s27 = int_to_ptr.vmem [resolvable:$true] %s26
      %29 = dma.hbm_to_vmem [thread:$0]  %s1, 128, %s27, [#allocation6]
    $region9: #{tpu_custom_call.1} parent=1 // pred_fallthru
      _
    // Predicated region
    $region10: #{tpu_custom_call.1} parent=1 // pred_check
      _
    $region11: #{tpu_custom_call.1} parent=1 // pred_check_branch
      %31 = sbr.rel (0) target = $region13
    $region12: #{tpu_custom_call.1} parent=1 // pred_region
      %32 = dma.done [#allocation3], 128
    $region13: #{tpu_custom_call.1} parent=1 // pred_fallthru
      _
    // Predicated region
    $region14: #{tpu_custom_call.1} parent=1 // pred_check
      _
    $region15: #{tpu_custom_call.1} parent=1 // pred_check_branch
      %34 = sbr.rel (0) target = $region17
    $region16: #{tpu_custom_call.1} parent=1 // pred_region
      %35 = dma.done [#allocation6], 128
    $region17: #{tpu_custom_call.1} parent=1 // pred_fallthru
      _
    %v36 = vld [vmem:[#allocation2] sm:$0xff]
    %v37 = vmul.f32 %v36, 0.33333334
    %v38 = vld [vmem:[#allocation5] sm:$0xff]
    %v39 = vmul.f32 %v38, 0.33333334
    %vm40 = vcmask 261120
    %v41 = vsel %vm40, %v37, -inf
    %42 = vmax.xlane.f32.xlu0 %v41
    %v43 = vpop.xlane.xlu0 %42
    %v44 = vsub.f32 %v37, %v43
    %v45 = vmul.f32 %v44, 1.442695
    %v46 = vpow.pop %v45
    %v47 = vsel %vm40, %v46, 0.0
    %48 = vadd.xlane.f32.xlu0 %v47
    %v49 = vpop.xlane.xlu0 %48
    %v50 = vlog2.pop %v49
    %v51 = vmul.f32 %v50, 0.6931472
    %v52 = vsub.f32 %v44, %v51
    %v53 = vsel %vm40, %v39, -inf
    %54 = vmax.xlane.f32.xlu0 %v53
    %v55 = vpop.xlane.xlu0 %54
    %v56 = vsub.f32 %v39, %v55
    %v57 = vmul.f32 %v56, 1.442695
    %v58 = vpow.pop %v57
    %v59 = vsel %vm40, %v58, 0.0
    %60 = vadd.xlane.f32.xlu0 %v59
    %v61 = vpop.xlane.xlu0 %60
    %v62 = vrcp.pop %v61
    %v63 = vmul.f32 %v58, %v62
    %v64 = vadd.f32 %v63, 1e-07
    %v65 = vlog2.pop %v64
    %v66 = vmul.f32 %v65, 0.6931472
    %v67 = vsub.f32 %v66, %v52
    %v68 = vmul.f32 %v64, %v67
    %v69 = vsel %vm40, %v68, 0.0
    %70 = vadd.xlane.f32.xlu0 %v69
    %v71 = vpop.xlane.xlu0 %70
    %v72 = vrot.slane %v71, 4
    %v73 = vadd.f32 %v71, %v72
    %v74 = vrot.slane %v73, 2
    %v75 = vadd.f32 %v73, %v74
    %v76 = vrot.slane %v75, 1
    %v77 = vadd.f32 %v75, %v76
    %s78 = vtos %v77
    %v79 = vstv %s78
    %80 = vst [vmem:[#allocation7] sm:$0xff] %v79
    // Predicated region
    $region18: #{tpu_custom_call.1} parent=1 // pred_check
      _
    $region19: #{tpu_custom_call.1} parent=1 // pred_check_branch
      %82 = sbr.rel (0) target = $region21
    $region20: #{tpu_custom_call.1} parent=1 // pred_region
      %s84 = ssub.s32 128, 128
      %85 = vsyncadd [#allocation4], %s84
      %s87 = sshll.u32 [#allocation7], 4
      %s88 = int_to_ptr.vmem [resolvable:$true] %s87
      %90 = dma.vmem_to_hbm [thread:$0]  %s88, 128, %s2, [#allocation4]
    $region21: #{tpu_custom_call.1} parent=1 // pred_fallthru
      _
    // Predicated region
    $region22: #{tpu_custom_call.1} parent=1 // pred_check
      _
    $region23: #{tpu_custom_call.1} parent=1 // pred_check_branch
      %92 = sbr.rel (0) target = $region25
    $region24: #{tpu_custom_call.1} parent=1 // pred_region
      %93 = dma.done [#allocation4], 128
    $region25: #{tpu_custom_call.1} parent=1 // pred_fallthru
      _
    %94 = vsyncpa [#allocation3], 1
    %95 = vsyncpa [#allocation6], 1
    %96 = vsyncpa [#allocation4], 1

</llo_original>
